<compile_context>
chip_gen: v5e
topology: v5e:2x2
jax: 0.10.0
libtpu: 0.0.40
codegen_flags: <defaults>
</compile_context>

<pallas_src>
import jax
import jax.numpy as jnp
from jax import lax
from jax.experimental import pallas as pl
from jax.experimental.pallas import tpu as pltpu

NEG_SLOPE = 0.1   # LeakyReLU negative_slope
BN_EPS = 1e-5     # nn.BatchNorm2d default eps


def timestep_block_kernel(x_ref, emb_ref, g1_ref, b1_ref, g2_ref, b2_ref,
                          a_ref, up_ref, dn_ref, rep_ref, w1_ref, w2_ref,
                          we_ref, be_ref, out_ref):
    f32 = jnp.float32
    x2 = x_ref[...]            # (N*H, W*C) lane-dense slab
    A = a_ref[...]             # (W*C, W*C) per-channel fold/tile matrix (includes 1/(N*H*W))
    B_up = up_ref[...]         # (N*H, N*H): row h <- row h-1 (0 at image top border)
    B_dn = dn_ref[...]         # (N*H, N*H): row h <- row h+1 (0 at image bottom border)

    def bn_lrelu(v, g_row, b_row):
        """Training-mode BatchNorm2d (batch stats) + LeakyReLU, fully lane-dense.

        v: (N*H, W*C); g_row/b_row: (1, W*C) pre-tiled per-channel params."""
        mean_row = jnp.sum(jnp.dot(v, A, preferred_element_type=f32),
                           axis=0, keepdims=True)                 # (1, W*C) per-channel mean
        d = v - mean_row
        var_row = jnp.sum(jnp.dot(d * d, A, preferred_element_type=f32),
                          axis=0, keepdims=True)                  # biased var, two-pass form
        s = g_row * lax.rsqrt(var_row + BN_EPS)
        y = d * s + b_row
        return jnp.where(y >= 0.0, y, NEG_SLOPE * y)              # LeakyReLU(0.1)

    def conv3x3(v, w_ref):
        """3x3 SAME conv, stride 1, no bias, as 3 lane-aligned matmuls.

        dy taps come from the row-shift matrices (zero padding at top/bottom included);
        dx taps + left/right zero padding are baked into the block-tridiagonal weights."""
        up = jnp.dot(B_up, v, preferred_element_type=f32)          # v at row h-1
        dn = jnp.dot(B_dn, v, preferred_element_type=f32)          # v at row h+1
        acc = jnp.dot(up, w_ref[0], preferred_element_type=f32)
        acc = acc + jnp.dot(v, w_ref[1], preferred_element_type=f32)
        acc = acc + jnp.dot(dn, w_ref[2], preferred_element_type=f32)
        return acc

    # bn1 -> leaky_relu1 -> conv1
    h = conv3x3(bn_lrelu(x2, g1_ref[...], b1_ref[...]), w1_ref)
    # bn2 -> leaky_relu2   (drop_rate == 0 -> F.dropout is the identity)
    h = bn_lrelu(h, g2_ref[...], b2_ref[...])

    # emb_layers: SiLU -> Linear (weights pre-tiled over W); broadcast over (H, W) via rep matmul
    e = emb_ref[...]
    sig = 1.0 / (1.0 + jnp.exp(-e))                                # exact sigmoid
    eo = jnp.dot(e * sig, we_ref[...], preferred_element_type=f32) + be_ref[...]   # (Np, W*Co)
    h = h + jnp.dot(rep_ref[...], eo, preferred_element_type=f32)                  # (N*H, W*Co)

    # conv2 + identity residual, lane-dense store
    h = conv3x3(h, w2_ref)
    out_ref[...] = (x2 + h).astype(out_ref.dtype)


def _tri_weights(w_hwio, W):
    """(3,3,C,Co) HWIO conv weights -> (3, W*C, W*Co) block-tridiagonal matrices.

    Wtri[dy][w*C + c, w'*Co + co] = w_hwio[dy, dx, c, co] with dx = w - w' + 1 (zero
    otherwise), realizing the dx taps and left/right SAME zero padding of a 3x3 conv."""
    _, _, C, Co = w_hwio.shape
    dt = w_hwio.dtype
    mats = []
    for dy in range(3):
        acc = jnp.zeros((W * C, W * Co), dt)
        for dx in range(3):
            sel = jnp.eye(W, k=1 - dx, dtype=dt)     # sel[w, w'] = 1 iff w = w' + dx - 1
            acc = acc + jnp.einsum('uv,io->uivo', sel, w_hwio[dy, dx]).reshape(W * C, W * Co)
        mats.append(acc)
    return jnp.stack(mats, axis=0)


def timestep_block(x_nchw, emb, params):
    """x_nchw: (N,C,H,W) f32; emb: (N,E) f32. Matches TimestepBlock.forward on the
    equalInOut / stride=1 / drop_rate=0 path with BatchNorm in training mode."""
    g1, b1, w1, g2, b2, w2, we, be = params
    x = jnp.transpose(x_nchw, (0, 2, 3, 1))            # NCHW -> NHWC
    N, H, W, C = x.shape
    Co = w1.shape[-1]
    assert C == Co, "only the equalInOut (stride=1, no convShortcut) path is implemented"
    NH, WC, WCo = N * H, W * C, W * Co
    E = emb.shape[-1]
    Np = max(8, ((N + 7) // 8) * 8)                    # pad batch rows for the emb matmul
    f32 = jnp.float32

    # Lane-dense activation slab and pre-tiled (lane-dense) parameters.
    x2 = x.reshape(NH, WC)
    emb_p = emb if Np == N else jnp.concatenate(
        [emb, jnp.zeros((Np - N, E), f32)], axis=0)
    tile_row = lambda v: jnp.tile(v.reshape(1, -1), (1, W))        # (1, W*C)
    g1r, b1r = tile_row(g1), tile_row(b1)
    g2r, b2r = tile_row(g2), tile_row(b2)
    ber = tile_row(be)                                             # (1, W*Co)
    wer = jnp.tile(we, (1, W))                                     # (E, W*Co)

    # Per-channel fold/tile matrix for BN stats (includes the 1/(N*H*W) normalization).
    A = jnp.kron(jnp.ones((W, W), f32), jnp.eye(C, dtype=f32)) / float(N * H * W)
    # Per-image row(=h) shift matrices; border zero padding comes from eye's k offset.
    B_up = jnp.kron(jnp.eye(N, dtype=f32), jnp.eye(H, k=-1, dtype=f32))    # (NH, NH)
    B_dn = jnp.kron(jnp.eye(N, dtype=f32), jnp.eye(H, k=+1, dtype=f32))    # (NH, NH)
    # Broadcast matrix for the emb add: rep[n*H + h, n] = 1.
    rep = jnp.zeros((NH, Np), f32).at[:, :N].set(
        jnp.kron(jnp.eye(N, dtype=f32), jnp.ones((H, 1), f32)))
    # Block-tridiagonal conv weights (contraction K = W*C, lane-aligned).
    w1t = _tri_weights(w1, W)
    w2t = _tri_weights(w2, W)

    operands = (x2, emb_p, g1r, b1r, g2r, b2r, A, B_up, B_dn, rep, w1t, w2t, wer, ber)
    io_bytes = sum(int(o.size) * o.dtype.itemsize for o in operands) + NH * WCo * 4
    vmem_limit = int(min(100 * 2**20, max(4 * 2**20, 2 * io_bytes + (1 << 20))))

    vmem = pl.BlockSpec(memory_space=pltpu.MemorySpace.VMEM)
    out2 = pl.pallas_call(
        timestep_block_kernel,
        out_shape=jax.ShapeDtypeStruct((NH, WCo), x.dtype),
        in_specs=[vmem] * len(operands),
        out_specs=vmem,
        compiler_params=pltpu.CompilerParams(vmem_limit_bytes=vmem_limit),
    )(*operands)

    out = out2.reshape(N, H, W, Co)
    return jnp.transpose(out, (0, 3, 1, 2))            # NHWC -> NCHW


def reference(x_nchw, emb, params):
    """Pure-JAX reference with identical semantics (for verification)."""
    g1, b1, w1, g2, b2, w2, we, be = params
    x = jnp.transpose(x_nchw, (0, 2, 3, 1))

    def bn(v, g, b):
        m = v.mean(axis=(0, 1, 2), keepdims=True)
        var = ((v - m) ** 2).mean(axis=(0, 1, 2), keepdims=True)
        return (v - m) / jnp.sqrt(var + BN_EPS) * g.reshape(1, 1, 1, -1) + b.reshape(1, 1, 1, -1)

    lrelu = lambda v: jnp.where(v >= 0, v, NEG_SLOPE * v)
    conv = lambda v, w: lax.conv_general_dilated(
        v, w, (1, 1), 'SAME', dimension_numbers=('NHWC', 'HWIO', 'NHWC'),
        precision=lax.Precision.HIGHEST)

    h = lrelu(bn(x, g1, b1))
    h = conv(h, w1)
    h = lrelu(bn(h, g2, b2))
    e = emb * jax.nn.sigmoid(emb)
    eo = e @ we + be
    h = h + eo[:, None, None, :]
    h = conv(h, w2)
    return jnp.transpose(x + h, (0, 3, 1, 2))


if __name__ == "__main__":
    # Small shapes consistent with the module: in_planes == out_planes == 16,
    # stride = 1, drop_rate = 0, emb_size = 128 (constructor arg, kept small).
    N, C, H, W = 2, 16, 8, 8
    E = 128

    key = jax.random.PRNGKey(0)
    ks = jax.random.split(key, 10)
    x = jax.random.normal(ks[0], (N, C, H, W), jnp.float32)
    emb = jax.random.normal(ks[1], (N, E), jnp.float32)

    # Deterministic synthetic parameters (shapes per module __init__).
    g1 = 1.0 + 0.1 * jax.random.normal(ks[2], (C,), jnp.float32)       # bn1 weight
    b1 = 0.1 * jax.random.normal(ks[3], (C,), jnp.float32)             # bn1 bias
    w1 = 0.1 * jax.random.normal(ks[4], (3, 3, C, C), jnp.float32)     # conv1 (HWIO)
    g2 = 1.0 + 0.1 * jax.random.normal(ks[5], (C,), jnp.float32)       # bn2 weight
    b2 = 0.1 * jax.random.normal(ks[6], (C,), jnp.float32)             # bn2 bias
    w2 = 0.1 * jax.random.normal(ks[7], (3, 3, C, C), jnp.float32)     # conv2 (HWIO)
    we = 0.05 * jax.random.normal(ks[8], (E, C), jnp.float32)          # emb Linear weight^T
    be = 0.05 * jax.random.normal(ks[9], (C,), jnp.float32)            # emb Linear bias
    params = (g1, b1, w1, g2, b2, w2, we, be)

    out = jax.block_until_ready(timestep_block(x, emb, params))
    ref = jax.block_until_ready(reference(x, emb, params))

    assert out.shape == (N, C, H, W) and out.dtype == jnp.float32
    max_err = float(jnp.max(jnp.abs(out - ref)))
    assert jnp.allclose(out, ref, atol=2e-3, rtol=2e-3), f"max |err| = {max_err}"
    print("KERNEL_OK")
</pallas_src>

<mosaic_0001>
module attributes {stable_mosaic.version = 11 : i64} {
  func.func @timestep_block_kernel(%arg0: memref<16x128xf32, #tpu.memory_space<vmem>>, %arg1: memref<8x128xf32, #tpu.memory_space<vmem>>, %arg2: memref<1x128xf32, #tpu.memory_space<vmem>>, %arg3: memref<1x128xf32, #tpu.memory_space<vmem>>, %arg4: memref<1x128xf32, #tpu.memory_space<vmem>>, %arg5: memref<1x128xf32, #tpu.memory_space<vmem>>, %arg6: memref<128x128xf32, #tpu.memory_space<vmem>>, %arg7: memref<16x16xf32, #tpu.memory_space<vmem>>, %arg8: memref<16x16xf32, #tpu.memory_space<vmem>>, %arg9: memref<16x8xf32, #tpu.memory_space<vmem>>, %arg10: memref<3x128x128xf32, #tpu.memory_space<vmem>>, %arg11: memref<3x128x128xf32, #tpu.memory_space<vmem>>, %arg12: memref<128x128xf32, #tpu.memory_space<vmem>>, %arg13: memref<1x128xf32, #tpu.memory_space<vmem>>, %arg14: memref<16x128xf32, #tpu.memory_space<vmem>>) attributes {dimension_semantics = [], scalar_prefetch = 0 : i64, scratch_operands = 0 : i64, tpu.core_type = #tpu.core_type<tc>} {
    %c0 = arith.constant 0 : index
    %c0_0 = arith.constant 0 : index
    %0 = vector.load %arg0[%c0, %c0_0] : memref<16x128xf32, #tpu.memory_space<vmem>>, vector<16x128xf32>
    %c0_1 = arith.constant 0 : index
    %c0_2 = arith.constant 0 : index
    %1 = vector.load %arg6[%c0_1, %c0_2] : memref<128x128xf32, #tpu.memory_space<vmem>>, vector<128x128xf32>
    %c0_3 = arith.constant 0 : index
    %c0_4 = arith.constant 0 : index
    %2 = vector.load %arg7[%c0_3, %c0_4] : memref<16x16xf32, #tpu.memory_space<vmem>>, vector<16x16xf32>
    %c0_5 = arith.constant 0 : index
    %c0_6 = arith.constant 0 : index
    %3 = vector.load %arg8[%c0_5, %c0_6] : memref<16x16xf32, #tpu.memory_space<vmem>>, vector<16x16xf32>
    %c0_7 = arith.constant 0 : index
    %c0_8 = arith.constant 0 : index
    %4 = vector.load %arg2[%c0_7, %c0_8] : memref<1x128xf32, #tpu.memory_space<vmem>>, vector<1x128xf32>
    %c0_9 = arith.constant 0 : index
    %c0_10 = arith.constant 0 : index
    %5 = vector.load %arg3[%c0_9, %c0_10] : memref<1x128xf32, #tpu.memory_space<vmem>>, vector<1x128xf32>
    %cst = arith.constant dense<0.000000e+00> : vector<16x128xf32>
    %6 = tpu.matmul %0, %1, %cst {dimension_numbers = #tpu.dot_dimension_numbers<[1], [0], [0], [1], [0, 0, 1, 1], [], []>} : vector<16x128xf32>, vector<128x128xf32>, vector<16x128xf32> -> vector<16x128xf32>
    %cst_11 = arith.constant dense<0.000000e+00> : vector<128xf32>
    %7 = vector.multi_reduction <add>, %6, %cst_11 [0] : vector<16x128xf32> to vector<128xf32>
    %8 = vector.shape_cast %7 : vector<128xf32> to vector<1x128xf32>
    %9 = vector.broadcast %8 : vector<1x128xf32> to vector<16x128xf32>
    %10 = arith.subf %0, %9 : vector<16x128xf32>
    %11 = arith.mulf %10, %10 : vector<16x128xf32>
    %cst_12 = arith.constant dense<0.000000e+00> : vector<16x128xf32>
    %12 = tpu.matmul %11, %1, %cst_12 {dimension_numbers = #tpu.dot_dimension_numbers<[1], [0], [0], [1], [0, 0, 1, 1], [], []>} : vector<16x128xf32>, vector<128x128xf32>, vector<16x128xf32> -> vector<16x128xf32>
    %cst_13 = arith.constant dense<0.000000e+00> : vector<128xf32>
    %13 = vector.multi_reduction <add>, %12, %cst_13 [0] : vector<16x128xf32> to vector<128xf32>
    %14 = vector.shape_cast %13 : vector<128xf32> to vector<1x128xf32>
    %cst_14 = arith.constant 9.99999974E-6 : f32
    %15 = vector.broadcast %cst_14 : f32 to vector<1x128xf32>
    %16 = arith.addf %14, %15 : vector<1x128xf32>
    %17 = math.rsqrt %16 : vector<1x128xf32>
    %18 = arith.mulf %4, %17 : vector<1x128xf32>
    %19 = vector.broadcast %18 : vector<1x128xf32> to vector<16x128xf32>
    %20 = arith.mulf %10, %19 : vector<16x128xf32>
    %21 = vector.broadcast %5 : vector<1x128xf32> to vector<16x128xf32>
    %22 = arith.addf %20, %21 : vector<16x128xf32>
    %cst_15 = arith.constant 0.000000e+00 : f32
    %23 = vector.broadcast %cst_15 : f32 to vector<16x128xf32>
    %24 = arith.cmpf oge, %22, %23 : vector<16x128xf32>
    %cst_16 = arith.constant 1.000000e-01 : f32
    %25 = vector.broadcast %cst_16 : f32 to vector<16x128xf32>
    %26 = arith.mulf %25, %22 : vector<16x128xf32>
    %27 = arith.select %24, %22, %26 : vector<16x128xi1>, vector<16x128xf32>
    %cst_17 = arith.constant dense<0.000000e+00> : vector<16x128xf32>
    %28 = tpu.matmul %2, %27, %cst_17 {dimension_numbers = #tpu.dot_dimension_numbers<[1], [0], [0], [1], [0, 0, 1, 1], [], []>} : vector<16x16xf32>, vector<16x128xf32>, vector<16x128xf32> -> vector<16x128xf32>
    %cst_18 = arith.constant dense<0.000000e+00> : vector<16x128xf32>
    %29 = tpu.matmul %3, %27, %cst_18 {dimension_numbers = #tpu.dot_dimension_numbers<[1], [0], [0], [1], [0, 0, 1, 1], [], []>} : vector<16x16xf32>, vector<16x128xf32>, vector<16x128xf32> -> vector<16x128xf32>
    %c0_19 = arith.constant 0 : index
    %c0_20 = arith.constant 0 : index
    %c0_21 = arith.constant 0 : index
    %30 = vector.load %arg10[%c0_19, %c0_20, %c0_21] : memref<3x128x128xf32, #tpu.memory_space<vmem>>, vector<1x128x128xf32>
    %31 = vector.shape_cast %30 : vector<1x128x128xf32> to vector<128x128xf32>
    %cst_22 = arith.constant dense<0.000000e+00> : vector<16x128xf32>
    %32 = tpu.matmul %28, %31, %cst_22 {dimension_numbers = #tpu.dot_dimension_numbers<[1], [0], [0], [1], [0, 0, 1, 1], [], []>} : vector<16x128xf32>, vector<128x128xf32>, vector<16x128xf32> -> vector<16x128xf32>
    %c1 = arith.constant 1 : index
    %c0_23 = arith.constant 0 : index
    %c0_24 = arith.constant 0 : index
    %33 = vector.load %arg10[%c1, %c0_23, %c0_24] : memref<3x128x128xf32, #tpu.memory_space<vmem>>, vector<1x128x128xf32>
    %34 = vector.shape_cast %33 : vector<1x128x128xf32> to vector<128x128xf32>
    %cst_25 = arith.constant dense<0.000000e+00> : vector<16x128xf32>
    %35 = tpu.matmul %27, %34, %cst_25 {dimension_numbers = #tpu.dot_dimension_numbers<[1], [0], [0], [1], [0, 0, 1, 1], [], []>} : vector<16x128xf32>, vector<128x128xf32>, vector<16x128xf32> -> vector<16x128xf32>
    %36 = arith.addf %32, %35 : vector<16x128xf32>
    %c2 = arith.constant 2 : index
    %c0_26 = arith.constant 0 : index
    %c0_27 = arith.constant 0 : index
    %37 = vector.load %arg10[%c2, %c0_26, %c0_27] : memref<3x128x128xf32, #tpu.memory_space<vmem>>, vector<1x128x128xf32>
    %38 = vector.shape_cast %37 : vector<1x128x128xf32> to vector<128x128xf32>
    %cst_28 = arith.constant dense<0.000000e+00> : vector<16x128xf32>
    %39 = tpu.matmul %29, %38, %cst_28 {dimension_numbers = #tpu.dot_dimension_numbers<[1], [0], [0], [1], [0, 0, 1, 1], [], []>} : vector<16x128xf32>, vector<128x128xf32>, vector<16x128xf32> -> vector<16x128xf32>
    %40 = arith.addf %36, %39 : vector<16x128xf32>
    %c0_29 = arith.constant 0 : index
    %c0_30 = arith.constant 0 : index
    %41 = vector.load %arg4[%c0_29, %c0_30] : memref<1x128xf32, #tpu.memory_space<vmem>>, vector<1x128xf32>
    %c0_31 = arith.constant 0 : index
    %c0_32 = arith.constant 0 : index
    %42 = vector.load %arg5[%c0_31, %c0_32] : memref<1x128xf32, #tpu.memory_space<vmem>>, vector<1x128xf32>
    %cst_33 = arith.constant dense<0.000000e+00> : vector<16x128xf32>
    %43 = tpu.matmul %40, %1, %cst_33 {dimension_numbers = #tpu.dot_dimension_numbers<[1], [0], [0], [1], [0, 0, 1, 1], [], []>} : vector<16x128xf32>, vector<128x128xf32>, vector<16x128xf32> -> vector<16x128xf32>
    %cst_34 = arith.constant dense<0.000000e+00> : vector<128xf32>
    %44 = vector.multi_reduction <add>, %43, %cst_34 [0] : vector<16x128xf32> to vector<128xf32>
    %45 = vector.shape_cast %44 : vector<128xf32> to vector<1x128xf32>
    %46 = vector.broadcast %45 : vector<1x128xf32> to vector<16x128xf32>
    %47 = arith.subf %40, %46 : vector<16x128xf32>
    %48 = arith.mulf %47, %47 : vector<16x128xf32>
    %cst_35 = arith.constant dense<0.000000e+00> : vector<16x128xf32>
    %49 = tpu.matmul %48, %1, %cst_35 {dimension_numbers = #tpu.dot_dimension_numbers<[1], [0], [0], [1], [0, 0, 1, 1], [], []>} : vector<16x128xf32>, vector<128x128xf32>, vector<16x128xf32> -> vector<16x128xf32>
    %cst_36 = arith.constant dense<0.000000e+00> : vector<128xf32>
    %50 = vector.multi_reduction <add>, %49, %cst_36 [0] : vector<16x128xf32> to vector<128xf32>
    %51 = vector.shape_cast %50 : vector<128xf32> to vector<1x128xf32>
    %cst_37 = arith.constant 9.99999974E-6 : f32
    %52 = vector.broadcast %cst_37 : f32 to vector<1x128xf32>
    %53 = arith.addf %51, %52 : vector<1x128xf32>
    %54 = math.rsqrt %53 : vector<1x128xf32>
    %55 = arith.mulf %41, %54 : vector<1x128xf32>
    %56 = vector.broadcast %55 : vector<1x128xf32> to vector<16x128xf32>
    %57 = arith.mulf %47, %56 : vector<16x128xf32>
    %58 = vector.broadcast %42 : vector<1x128xf32> to vector<16x128xf32>
    %59 = arith.addf %57, %58 : vector<16x128xf32>
    %cst_38 = arith.constant 0.000000e+00 : f32
    %60 = vector.broadcast %cst_38 : f32 to vector<16x128xf32>
    %61 = arith.cmpf oge, %59, %60 : vector<16x128xf32>
    %cst_39 = arith.constant 1.000000e-01 : f32
    %62 = vector.broadcast %cst_39 : f32 to vector<16x128xf32>
    %63 = arith.mulf %62, %59 : vector<16x128xf32>
    %64 = arith.select %61, %59, %63 : vector<16x128xi1>, vector<16x128xf32>
    %c0_40 = arith.constant 0 : index
    %c0_41 = arith.constant 0 : index
    %65 = vector.load %arg1[%c0_40, %c0_41] : memref<8x128xf32, #tpu.memory_space<vmem>>, vector<8x128xf32>
    %cst_42 = arith.constant 0.000000e+00 : f32
    %66 = vector.broadcast %cst_42 : f32 to vector<8x128xf32>
    %67 = arith.subf %66, %65 : vector<8x128xf32>
    %68 = math.exp %67 : vector<8x128xf32>
    %cst_43 = arith.constant 1.000000e+00 : f32
    %69 = vector.broadcast %cst_43 : f32 to vector<8x128xf32>
    %70 = arith.addf %69, %68 : vector<8x128xf32>
    %cst_44 = arith.constant 1.000000e+00 : f32
    %71 = vector.broadcast %cst_44 : f32 to vector<8x128xf32>
    %72 = arith.divf %71, %70 : vector<8x128xf32>
    %73 = arith.mulf %65, %72 : vector<8x128xf32>
    %c0_45 = arith.constant 0 : index
    %c0_46 = arith.constant 0 : index
    %74 = vector.load %arg12[%c0_45, %c0_46] : memref<128x128xf32, #tpu.memory_space<vmem>>, vector<128x128xf32>
    %cst_47 = arith.constant dense<0.000000e+00> : vector<8x128xf32>
    %75 = tpu.matmul %73, %74, %cst_47 {dimension_numbers = #tpu.dot_dimension_numbers<[1], [0], [0], [1], [0, 0, 1, 1], [], []>} : vector<8x128xf32>, vector<128x128xf32>, vector<8x128xf32> -> vector<8x128xf32>
    %c0_48 = arith.constant 0 : index
    %c0_49 = arith.constant 0 : index
    %76 = vector.load %arg13[%c0_48, %c0_49] : memref<1x128xf32, #tpu.memory_space<vmem>>, vector<1x128xf32>
    %77 = vector.broadcast %76 : vector<1x128xf32> to vector<8x128xf32>
    %78 = arith.addf %75, %77 : vector<8x128xf32>
    %c0_50 = arith.constant 0 : index
    %c0_51 = arith.constant 0 : index
    %79 = vector.load %arg9[%c0_50, %c0_51] : memref<16x8xf32, #tpu.memory_space<vmem>>, vector<16x8xf32>
    %cst_52 = arith.constant dense<0.000000e+00> : vector<16x128xf32>
    %80 = tpu.matmul %79, %78, %cst_52 {dimension_numbers = #tpu.dot_dimension_numbers<[1], [0], [0], [1], [0, 0, 1, 1], [], []>} : vector<16x8xf32>, vector<8x128xf32>, vector<16x128xf32> -> vector<16x128xf32>
    %81 = arith.addf %64, %80 : vector<16x128xf32>
    %cst_53 = arith.constant dense<0.000000e+00> : vector<16x128xf32>
    %82 = tpu.matmul %2, %81, %cst_53 {dimension_numbers = #tpu.dot_dimension_numbers<[1], [0], [0], [1], [0, 0, 1, 1], [], []>} : vector<16x16xf32>, vector<16x128xf32>, vector<16x128xf32> -> vector<16x128xf32>
    %cst_54 = arith.constant dense<0.000000e+00> : vector<16x128xf32>
    %83 = tpu.matmul %3, %81, %cst_54 {dimension_numbers = #tpu.dot_dimension_numbers<[1], [0], [0], [1], [0, 0, 1, 1], [], []>} : vector<16x16xf32>, vector<16x128xf32>, vector<16x128xf32> -> vector<16x128xf32>
    %c0_55 = arith.constant 0 : index
    %c0_56 = arith.constant 0 : index
    %c0_57 = arith.constant 0 : index
    %84 = vector.load %arg11[%c0_55, %c0_56, %c0_57] : memref<3x128x128xf32, #tpu.memory_space<vmem>>, vector<1x128x128xf32>
    %85 = vector.shape_cast %84 : vector<1x128x128xf32> to vector<128x128xf32>
    %cst_58 = arith.constant dense<0.000000e+00> : vector<16x128xf32>
    %86 = tpu.matmul %82, %85, %cst_58 {dimension_numbers = #tpu.dot_dimension_numbers<[1], [0], [0], [1], [0, 0, 1, 1], [], []>} : vector<16x128xf32>, vector<128x128xf32>, vector<16x128xf32> -> vector<16x128xf32>
    %c1_59 = arith.constant 1 : index
    %c0_60 = arith.constant 0 : index
    %c0_61 = arith.constant 0 : index
    %87 = vector.load %arg11[%c1_59, %c0_60, %c0_61] : memref<3x128x128xf32, #tpu.memory_space<vmem>>, vector<1x128x128xf32>
    %88 = vector.shape_cast %87 : vector<1x128x128xf32> to vector<128x128xf32>
    %cst_62 = arith.constant dense<0.000000e+00> : vector<16x128xf32>
    %89 = tpu.matmul %81, %88, %cst_62 {dimension_numbers = #tpu.dot_dimension_numbers<[1], [0], [0], [1], [0, 0, 1, 1], [], []>} : vector<16x128xf32>, vector<128x128xf32>, vector<16x128xf32> -> vector<16x128xf32>
    %90 = arith.addf %86, %89 : vector<16x128xf32>
    %c2_63 = arith.constant 2 : index
    %c0_64 = arith.constant 0 : index
    %c0_65 = arith.constant 0 : index
    %91 = vector.load %arg11[%c2_63, %c0_64, %c0_65] : memref<3x128x128xf32, #tpu.memory_space<vmem>>, vector<1x128x128xf32>
    %92 = vector.shape_cast %91 : vector<1x128x128xf32> to vector<128x128xf32>
    %cst_66 = arith.constant dense<0.000000e+00> : vector<16x128xf32>
    %93 = tpu.matmul %83, %92, %cst_66 {dimension_numbers = #tpu.dot_dimension_numbers<[1], [0], [0], [1], [0, 0, 1, 1], [], []>} : vector<16x128xf32>, vector<128x128xf32>, vector<16x128xf32> -> vector<16x128xf32>
    %94 = arith.addf %90, %93 : vector<16x128xf32>
    %95 = arith.addf %0, %94 : vector<16x128xf32>
    %c0_67 = arith.constant 0 : index
    %c0_68 = arith.constant 0 : index
    %96 = vector.load %arg14[%c0_67, %c0_68] : memref<16x128xf32, #tpu.memory_space<vmem>>, vector<16x128xf32>
    tpu.vector_store %arg14[%c0_67, %c0_68], %95 {strides = array<i32>} : memref<16x128xf32, #tpu.memory_space<vmem>>, vector<16x128xf32>,
    return
  }
}

</mosaic_0001>

<llo_original>
// kernel: tpu_custom_call.1
$region0: #{tpu_custom_call.1}
  #allocation0 [shape = 'u32[]', space=smem, size = 0x4, offset = 0x4, fixed_abs, tag = 'smem constant byte address 0x4 - core index']
  #allocation1 [shape = 'u32[72,128]{1,0:T(1,128)}', space=vmem, size = 0x9000, scoped, tag = 'internal scratch']
  %s0 = inlined_call_operand.vmem [shape: f32[16,128], index: 0, kind: input, shape index: {}]
  %s1 = inlined_call_operand.vmem [shape: f32[8,128], index: 1, kind: input, shape index: {}]
  %s2 = inlined_call_operand.hbm [shape: f32[1,128], index: 2, kind: input, shape index: {}]
  %s3 = inlined_call_operand.hbm [shape: f32[1,128], index: 3, kind: input, shape index: {}]
  %s4 = inlined_call_operand.hbm [shape: f32[1,128], index: 4, kind: input, shape index: {}]
  %s5 = inlined_call_operand.hbm [shape: f32[1,128], index: 5, kind: input, shape index: {}]
  %s6 = inlined_call_operand.hbm [shape: f32[128,128], index: 6, kind: input, shape index: {}]
  %s7 = inlined_call_operand.hbm [shape: f32[16,16], index: 7, kind: input, shape index: {}]
  %s8 = inlined_call_operand.hbm [shape: f32[16,16], index: 8, kind: input, shape index: {}]
  %s9 = inlined_call_operand.vmem [shape: f32[16,8], index: 9, kind: input, shape index: {}]
  %s10 = inlined_call_operand.hbm [shape: f32[3,128,128], index: 10, kind: input, shape index: {}]
  %s11 = inlined_call_operand.hbm [shape: f32[3,128,128], index: 11, kind: input, shape index: {}]
  %s12 = inlined_call_operand.hbm [shape: f32[128,128], index: 12, kind: input, shape index: {}]
  %s13 = inlined_call_operand.vmem [shape: f32[1,128], index: 13, kind: input, shape index: {}]
  %s14 = inlined_call_operand.hbm [shape: f32[16,128], index: 14, kind: output, shape index: {}]
  %s15 = sld [smem:[#allocation0]]
  $region106: #{tpu_custom_call.1} parent=0
    _
  %s17 = ssub.s32 1, %s15
  %s18 = scalar_select 0, %s17, %s15
  $region1: #{tpu_custom_call.1} parent=0
    #allocation2 [shape = 'u8[512]{0}', space=vmem, size = 0x400, scoped, tag = 'input window, operand 2, single buffered']
    #allocation3 [shape = 's32[1]{0}', space=sflag, size = 0x4, scoped, tag = 'scoped memory for tpu_custom_call.1']
    #allocation4 [shape = 's32[1]{0}', space=sflag, size = 0x4, scoped, tag = 'scoped memory for tpu_custom_call.1']
    #allocation5 [shape = 'u8[512]{0}', space=vmem, size = 0x400, scoped, tag = 'input window, operand 3, single buffered']
    #allocation6 [shape = 's32[1]{0}', space=sflag, size = 0x4, scoped, tag = 'scoped memory for tpu_custom_call.1']
    #allocation7 [shape = 'u8[512]{0}', space=vmem, size = 0x400, scoped, tag = 'input window, operand 4, single buffered']
    #allocation8 [shape = 'u8[512]{0}', space=vmem, size = 0x400, scoped, tag = 'input window, operand 5, single buffered']
    #allocation9 [shape = 's32[1]{0}', space=sflag, size = 0x4, scoped, tag = 'scoped memory for tpu_custom_call.1']
    #allocation10 [shape = 'u8[65536]{0}', space=vmem, size = 0x10000, scoped, tag = 'input window, operand 6, single buffered']
    #allocation11 [shape = 'u8[8192]{0}', space=vmem, size = 0x2000, scoped, tag = 'input window, operand 7, single buffered']
    #allocation12 [shape = 's32[1]{0}', space=sflag, size = 0x4, scoped, tag = 'scoped memory for tpu_custom_call.1']
    #allocation13 [shape = 'u8[8192]{0}', space=vmem, size = 0x2000, scoped, tag = 'input window, operand 8, single buffered']
    #allocation14 [shape = 'u8[196608]{0}', space=vmem, size = 0x30000, scoped, tag = 'input window, operand 10, single buffered']
    #allocation15 [shape = 's32[1]{0}', space=sflag, size = 0x4, scoped, tag = 'scoped memory for tpu_custom_call.1']
    #allocation16 [shape = 'u8[196608]{0}', space=vmem, size = 0x30000, scoped, tag = 'input window, operand 11, single buffered']
    #allocation17 [shape = 'u8[65536]{0}', space=vmem, size = 0x10000, scoped, tag = 'input window, operand 12, single buffered']
    #allocation18 [shape = 's32[1]{0}', space=sflag, size = 0x4, scoped, tag = 'scoped memory for tpu_custom_call.1']
    #allocation19 [shape = 'u8[8192]{0}', space=vmem, size = 0x2000, scoped, tag = 'output window, operand 0, single buffered']
    %19 = vsyncpa [#allocation3], 0
    %20 = vsyncpa [#allocation6], 0
    %21 = vsyncpa [#allocation9], 0
    %22 = vsyncpa [#allocation12], 0
    %23 = vsyncpa [#allocation15], 0
    %24 = vsyncpa [#allocation18], 0
    %25 = vsyncpa [#allocation4], 0
    // Predicated region
    $region2: #{tpu_custom_call.1} parent=1 // pred_check
      _
    $region3: #{tpu_custom_call.1} parent=1 // pred_check_branch
      %27 = sbr.rel (0) target = $region5
    $region4: #{tpu_custom_call.1} parent=1 // pred_region
      _
    $region5: #{tpu_custom_call.1} parent=1 // pred_fallthru
      _
    // Predicated region
    $region6: #{tpu_custom_call.1} parent=1 // pred_check
      _
    $region7: #{tpu_custom_call.1} parent=1 // pred_check_branch
      %29 = sbr.rel (0) target = $region9
    $region8: #{tpu_custom_call.1} parent=1 // pred_region
      _
    $region9: #{tpu_custom_call.1} parent=1 // pred_fallthru
      _
    // Predicated region
    $region10: #{tpu_custom_call.1} parent=1 // pred_check
      _
    $region11: #{tpu_custom_call.1} parent=1 // pred_check_branch
      %31 = sbr.rel (0) target = $region13
    $region12: #{tpu_custom_call.1} parent=1 // pred_region
      %33 = vsyncadd [#allocation3], 0
      %s35 = sshll.u32 %s2, 4
      %s36 = int_to_ptr.hbm [resolvable:$true] %s35
      %s37 = sshll.u32 [#allocation2], 4
      %s38 = int_to_ptr.vmem [resolvable:$true] %s37
      %40 = dma.hbm_to_vmem [thread:$0]  %s36, 16, %s38, [#allocation3]
    $region13: #{tpu_custom_call.1} parent=1 // pred_fallthru
      _
    // Predicated region
    $region14: #{tpu_custom_call.1} parent=1 // pred_check
      _
    $region15: #{tpu_custom_call.1} parent=1 // pred_check_branch
      %42 = sbr.rel (0) target = $region17
    $region16: #{tpu_custom_call.1} parent=1 // pred_region
      %44 = vsyncadd [#allocation6], 0
      %s46 = sshll.u32 %s3, 4
      %s47 = int_to_ptr.hbm [resolvable:$true] %s46
      %s48 = sshll.u32 [#allocation5], 4
      %s49 = int_to_ptr.vmem [resolvable:$true] %s48
      %51 = dma.hbm_to_vmem [thread:$0]  %s47, 16, %s49, [#allocation6]
    $region17: #{tpu_custom_call.1} parent=1 // pred_fallthru
      _
    // Predicated region
    $region18: #{tpu_custom_call.1} parent=1 // pred_check
      _
    $region19: #{tpu_custom_call.1} parent=1 // pred_check_branch
      %53 = sbr.rel (0) target = $region21
    $region20: #{tpu_custom_call.1} parent=1 // pred_region
      %55 = vsyncadd [#allocation6], 0
      %s57 = sshll.u32 %s4, 4
      %s58 = int_to_ptr.hbm [resolvable:$true] %s57
      %s59 = sshll.u32 [#allocation7], 4
      %s60 = int_to_ptr.vmem [resolvable:$true] %s59
      %62 = dma.hbm_to_vmem [thread:$0]  %s58, 16, %s60, [#allocation6]
    $region21: #{tpu_custom_call.1} parent=1 // pred_fallthru
      _
    // Predicated region
    $region22: #{tpu_custom_call.1} parent=1 // pred_check
      _
    $region23: #{tpu_custom_call.1} parent=1 // pred_check_branch
      %64 = sbr.rel (0) target = $region25
    $region24: #{tpu_custom_call.1} parent=1 // pred_region
      %66 = vsyncadd [#allocation9], 0
      %s68 = sshll.u32 %s5, 4
      %s69 = int_to_ptr.hbm [resolvable:$true] %s68
      %s70 = sshll.u32 [#allocation8], 4
      %s71 = int_to_ptr.vmem [resolvable:$true] %s70
      %73 = dma.hbm_to_vmem [thread:$0]  %s69, 16, %s71, [#allocation9]
    $region25: #{tpu_custom_call.1} parent=1 // pred_fallthru
      _
    // Predicated region
    $region26: #{tpu_custom_call.1} parent=1 // pred_check
      _
    $region27: #{tpu_custom_call.1} parent=1 // pred_check_branch
      %75 = sbr.rel (0) target = $region29
    $region28: #{tpu_custom_call.1} parent=1 // pred_region
      %77 = vsyncadd [#allocation9], 0
      %s78 = sshll.u32 %s6, 4
      %s79 = int_to_ptr.hbm [resolvable:$true] %s78
      %s80 = sshll.u32 [#allocation10], 4
      %s81 = int_to_ptr.vmem [resolvable:$true] %s80
      %86 = dma.hbm_to_vmem [thread:$0]  %s79, 2048, %s81, [#allocation9], 128, 128, 8
    $region29: #{tpu_custom_call.1} parent=1 // pred_fallthru
      _
    // Predicated region
    $region30: #{tpu_custom_call.1} parent=1 // pred_check
      _
    $region31: #{tpu_custom_call.1} parent=1 // pred_check_branch
      %88 = sbr.rel (0) target = $region33
    $region32: #{tpu_custom_call.1} parent=1 // pred_region
      %90 = vsyncadd [#allocation12], 0
      %s91 = sshll.u32 %s7, 4
      %s92 = int_to_ptr.hbm [resolvable:$true] %s91
      %s93 = sshll.u32 [#allocation11], 4
      %s94 = int_to_ptr.vmem [resolvable:$true] %s93
      %99 = dma.hbm_to_vmem [thread:$0]  %s92, 256, %s94, [#allocation12], 128, 128, 8
    $region33: #{tpu_custom_call.1} parent=1 // pred_fallthru
      _
    // Predicated region
    $region34: #{tpu_custom_call.1} parent=1 // pred_check
      _
    $region35: #{tpu_custom_call.1} parent=1 // pred_check_branch
      %101 = sbr.rel (0) target = $region37
    $region36: #{tpu_custom_call.1} parent=1 // pred_region
      %103 = vsyncadd [#allocation12], 0
      %s104 = sshll.u32 %s8, 4
      %s105 = int_to_ptr.hbm [resolvable:$true] %s104
      %s106 = sshll.u32 [#allocation13], 4
      %s107 = int_to_ptr.vmem [resolvable:$true] %s106
      %112 = dma.hbm_to_vmem [thread:$0]  %s105, 256, %s107, [#allocation12], 128, 128, 8
    $region37: #{tpu_custom_call.1} parent=1 // pred_fallthru
      _
    // Predicated region
    $region38: #{tpu_custom_call.1} parent=1 // pred_check
      _
    $region39: #{tpu_custom_call.1} parent=1 // pred_check_branch
      %114 = sbr.rel (0) target = $region41
    $region40: #{tpu_custom_call.1} parent=1 // pred_region
      _
    $region41: #{tpu_custom_call.1} parent=1 // pred_fallthru
      _
    // Predicated region
    $region42: #{tpu_custom_call.1} parent=1 // pred_check
      _
    $region43: #{tpu_custom_call.1} parent=1 // pred_check_branch
      %116 = sbr.rel (0) target = $region45
    $region44: #{tpu_custom_call.1} parent=1 // pred_region
      %118 = vsyncadd [#allocation15], 0
      %s119 = sshll.u32 %s10, 4
      %s120 = int_to_ptr.hbm [resolvable:$true] %s119
      %s121 = sshll.u32 [#allocation14], 4
      %s122 = int_to_ptr.vmem [resolvable:$true] %s121
      %127 = dma.hbm_to_vmem [thread:$0]  %s120, 6144, %s122, [#allocation15], 128, 128, 8
    $region45: #{tpu_custom_call.1} parent=1 // pred_fallthru
      _
    // Predicated region
    $region46: #{tpu_custom_call.1} parent=1 // pred_check
      _
    $region47: #{tpu_custom_call.1} parent=1 // pred_check_branch
      %129 = sbr.rel (0) target = $region49
    $region48: #{tpu_custom_call.1} parent=1 // pred_region
      %131 = vsyncadd [#allocation15], 0
      %s132 = sshll.u32 %s11, 4
      %s133 = int_to_ptr.hbm [resolvable:$true] %s132
      %s134 = sshll.u32 [#allocation16], 4
      %s135 = int_to_ptr.vmem [resolvable:$true] %s134
      %140 = dma.hbm_to_vmem [thread:$0]  %s133, 6144, %s135, [#allocation15], 128, 128, 8
    $region49: #{tpu_custom_call.1} parent=1 // pred_fallthru
      _
    // Predicated region
    $region50: #{tpu_custom_call.1} parent=1 // pred_check
      _
    $region51: #{tpu_custom_call.1} parent=1 // pred_check_branch
      %142 = sbr.rel (0) target = $region53
    $region52: #{tpu_custom_call.1} parent=1 // pred_region
      %144 = vsyncadd [#allocation18], 0
      %s145 = sshll.u32 %s12, 4
      %s146 = int_to_ptr.hbm [resolvable:$true] %s145
      %s147 = sshll.u32 [#allocation17], 4
      %s148 = int_to_ptr.vmem [resolvable:$true] %s147
      %153 = dma.hbm_to_vmem [thread:$0]  %s146, 2048, %s148, [#allocation18], 128, 128, 8
    $region53: #{tpu_custom_call.1} parent=1 // pred_fallthru
      _
    // Predicated region
    $region54: #{tpu_custom_call.1} parent=1 // pred_check
      _
    $region55: #{tpu_custom_call.1} parent=1 // pred_check_branch
      %155 = sbr.rel (0) target = $region57
    $region56: #{tpu_custom_call.1} parent=1 // pred_region
      _
    $region57: #{tpu_custom_call.1} parent=1 // pred_fallthru
      _
    // Predicated region
    $region58: #{tpu_custom_call.1} parent=1 // pred_check
      _
    $region59: #{tpu_custom_call.1} parent=1 // pred_check_branch
      %157 = sbr.rel (0) target = $region61
    $region60: #{tpu_custom_call.1} parent=1 // pred_region
      %159 = dma.done [#allocation3], 16
    $region61: #{tpu_custom_call.1} parent=1 // pred_fallthru
      _
    // Predicated region
    $region62: #{tpu_custom_call.1} parent=1 // pred_check
      _
    $region63: #{tpu_custom_call.1} parent=1 // pred_check_branch
      %161 = sbr.rel (0) target = $region65
    $region64: #{tpu_custom_call.1} parent=1 // pred_region
      %163 = dma.done [#allocation6], 16
    $region65: #{tpu_custom_call.1} parent=1 // pred_fallthru
      _
    // Predicated region
    $region66: #{tpu_custom_call.1} parent=1 // pred_check
      _
    $region67: #{tpu_custom_call.1} parent=1 // pred_check_branch
      %165 = sbr.rel (0) target = $region69
    $region68: #{tpu_custom_call.1} parent=1 // pred_region
      %167 = dma.done [#allocation6], 16
    $region69: #{tpu_custom_call.1} parent=1 // pred_fallthru
      _
    // Predicated region
    $region70: #{tpu_custom_call.1} parent=1 // pred_check
      _
    $region71: #{tpu_custom_call.1} parent=1 // pred_check_branch
      %169 = sbr.rel (0) target = $region73
    $region72: #{tpu_custom_call.1} parent=1 // pred_region
      %171 = dma.done [#allocation9], 16
    $region73: #{tpu_custom_call.1} parent=1 // pred_fallthru
      _
    // Predicated region
    $region74: #{tpu_custom_call.1} parent=1 // pred_check
      _
    $region75: #{tpu_custom_call.1} parent=1 // pred_check_branch
      %173 = sbr.rel (0) target = $region77
    $region76: #{tpu_custom_call.1} parent=1 // pred_region
      %175 = dma.done [#allocation9], 2048
    $region77: #{tpu_custom_call.1} parent=1 // pred_fallthru
      _
    // Predicated region
    $region78: #{tpu_custom_call.1} parent=1 // pred_check
      _
    $region79: #{tpu_custom_call.1} parent=1 // pred_check_branch
      %177 = sbr.rel (0) target = $region81
    $region80: #{tpu_custom_call.1} parent=1 // pred_region
      %179 = dma.done [#allocation12], 256
    $region81: #{tpu_custom_call.1} parent=1 // pred_fallthru
      _
    // Predicated region
    $region82: #{tpu_custom_call.1} parent=1 // pred_check
      _
    $region83: #{tpu_custom_call.1} parent=1 // pred_check_branch
      %181 = sbr.rel (0) target = $region85
    $region84: #{tpu_custom_call.1} parent=1 // pred_region
      %183 = dma.done [#allocation12], 256
    $region85: #{tpu_custom_call.1} parent=1 // pred_fallthru
      _
    // Predicated region
    $region86: #{tpu_custom_call.1} parent=1 // pred_check
      _
    $region87: #{tpu_custom_call.1} parent=1 // pred_check_branch
      %185 = sbr.rel (0) target = $region89
    $region88: #{tpu_custom_call.1} parent=1 // pred_region
      %187 = dma.done [#allocation15], 6144
    $region89: #{tpu_custom_call.1} parent=1 // pred_fallthru
      _
    // Predicated region
    $region90: #{tpu_custom_call.1} parent=1 // pred_check
      _
    $region91: #{tpu_custom_call.1} parent=1 // pred_check_branch
      %189 = sbr.rel (0) target = $region93
    $region92: #{tpu_custom_call.1} parent=1 // pred_region
      %191 = dma.done [#allocation15], 6144
    $region93: #{tpu_custom_call.1} parent=1 // pred_fallthru
      _
    // Predicated region
    $region94: #{tpu_custom_call.1} parent=1 // pred_check
      _
    $region95: #{tpu_custom_call.1} parent=1 // pred_check_branch
      %193 = sbr.rel (0) target = $region97
    $region96: #{tpu_custom_call.1} parent=1 // pred_region
      %195 = dma.done [#allocation18], 2048
    $region97: #{tpu_custom_call.1} parent=1 // pred_fallthru
      _
    %v196 = vld [vmem:[%s0] sm:$0xff]
    %v197 = vld [vmem:[%s0 + $0x8] sm:$0xff]
    %v198 = vld [vmem:[#allocation10] sm:$0xff]
    %v199 = vld [vmem:[#allocation10 + $0x8] sm:$0xff]
    %v200 = vld [vmem:[#allocation10 + $0x10] sm:$0xff]
    %v201 = vld [vmem:[#allocation10 + $0x18] sm:$0xff]
    %v202 = vld [vmem:[#allocation10 + $0x20] sm:$0xff]
    %v203 = vld [vmem:[#allocation10 + $0x28] sm:$0xff]
    %v204 = vld [vmem:[#allocation10 + $0x30] sm:$0xff]
    %v205 = vld [vmem:[#allocation10 + $0x38] sm:$0xff]
    %v206 = vld [vmem:[#allocation10 + $0x40] sm:$0xff]
    %v207 = vld [vmem:[#allocation10 + $0x48] sm:$0xff]
    %v208 = vld [vmem:[#allocation10 + $0x50] sm:$0xff]
    %v209 = vld [vmem:[#allocation10 + $0x58] sm:$0xff]
    %v210 = vld [vmem:[#allocation10 + $0x60] sm:$0xff]
    %v211 = vld [vmem:[#allocation10 + $0x68] sm:$0xff]
    %v212 = vld [vmem:[#allocation10 + $0x70] sm:$0xff]
    %v213 = vld [vmem:[#allocation10 + $0x78] sm:$0xff]
    %v214 = vld [vmem:[#allocation11] sm:$0xff]
    %v215 = vld [vmem:[#allocation11 + $0x8] sm:$0xff]
    %v216 = vld [vmem:[#allocation13] sm:$0xff]
    %v217 = vld [vmem:[#allocation13 + $0x8] sm:$0xff]
    %v218 = vld [vmem:[#allocation2] sm:$0x1]
    %v219 = vld [vmem:[#allocation5] sm:$0x1]
    %220 = vmatpush.msra.mxu0 %v213
    %221 = vmatpush.msra.mxu0 %v212
    %222 = vmatpush.msra.mxu0 %v211
    %223 = vmatpush.msra.mxu0 %v210
    %224 = vmatpush.msra.mxu0 %v209
    %225 = vmatpush.msra.mxu0 %v208
    %226 = vmatpush.msra.mxu0 %v207
    %227 = vmatpush.msra.mxu0 %v206
    %228 = vmatpush.msra.mxu0 %v205
    %229 = vmatpush.msra.mxu0 %v204
    %230 = vmatpush.msra.mxu0 %v203
    %231 = vmatpush.msra.mxu0 %v202
    %232 = vmatpush.msra.mxu0 %v201
    %233 = vmatpush.msra.mxu0 %v200
    %234 = vmatpush.msra.mxu0 %v199
    %235 = vmatpush.msra.mxu0 %v198
    %236 = vmatmul.f32.gmra.mxu0 %v196
    %v237 = vpop.f32.mrf.mxu0
    %v238 = vadd.f32 0.0, %v237
    %239 = vmatmul.f32.gmra.mxu0 %v197
    %v240 = vpop.f32.mrf.mxu0
    %v241 = vadd.f32 0.0, %v240
    %242 = vdwg.mxu0
    %v243 = vadd.f32 %v238, %v241
    %v244 = vrot.slane %v243, 4
    %v245 = vadd.f32 %v243, %v244
    %v246 = vrot.slane %v245, 2
    %v247 = vadd.f32 %v245, %v246
    %v248 = vrot.slane %v247, 1
    %v249 = vadd.f32 %v247, %v248
    %v250 = vsub.f32 %v196, %v249
    %v251 = vsub.f32 %v197, %v249
    %v252 = vmul.f32 %v250, %v250
    %v253 = vmul.f32 %v251, %v251
    %254 = vmatpush.msra.mxu0 %v213
    %255 = vmatpush.msra.mxu0 %v212
    %256 = vmatpush.msra.mxu0 %v211
    %257 = vmatpush.msra.mxu0 %v210
    %258 = vmatpush.msra.mxu0 %v209
    %259 = vmatpush.msra.mxu0 %v208
    %260 = vmatpush.msra.mxu0 %v207
    %261 = vmatpush.msra.mxu0 %v206
    %262 = vmatpush.msra.mxu0 %v205
    %263 = vmatpush.msra.mxu0 %v204
    %264 = vmatpush.msra.mxu0 %v203
    %265 = vmatpush.msra.mxu0 %v202
    %266 = vmatpush.msra.mxu0 %v201
    %267 = vmatpush.msra.mxu0 %v200
    %268 = vmatpush.msra.mxu0 %v199
    %269 = vmatpush.msra.mxu0 %v198
    %270 = vmatmul.f32.gmra.mxu0 %v252
    %v271 = vpop.f32.mrf.mxu0
    %v272 = vadd.f32 0.0, %v271
    %273 = vmatmul.f32.gmra.mxu0 %v253
    %v274 = vpop.f32.mrf.mxu0
    %v275 = vadd.f32 0.0, %v274
    %276 = vdwg.mxu0
    %v277 = vadd.f32 %v272, %v275
    %v278 = vrot.slane %v277, 4
    %v279 = vadd.f32 %v277, %v278
    %v280 = vrot.slane %v279, 2
    %v281 = vadd.f32 %v279, %v280
    %v282 = vrot.slane %v281, 1
    %v283 = vadd.f32 %v281, %v282
    %v284 = vadd.f32 %v283, 1e-05
    %v285 = vrsqrt.pop %v284
    %v286 = vmul.f32 %v285, %v284
    %v287 = vmul.f32 %v286, %v285
    %v288 = vmul.f32 0.5, %v287
    %v289 = vsub.f32 1.5, %v288
    %v290 = vmul.f32 %v285, %v289
    %vm291 = vweird.f32 %v284
    %vm292 = vweird.f32 %v285
    %vm293 = vmor %vm291, %vm292
    %v294 = vsel %vm293, %v285, %v290
    %v295 = vmul.f32 %v218, %v294
    %v297 = vperm.slane %v295, 0
    %v299 = vmul.f32 %v250, %v297
    %v300 = vmul.f32 %v251, %v297
    %v302 = vperm.slane %v219, 0
    %v304 = vadd.f32 %v299, %v302
    %v305 = vadd.f32 %v300, %v302
    %vm306 = vcmp.ge.f32.partialorder %v304, 0.0
    %vm307 = vcmp.ge.f32.partialorder %v305, 0.0
    %v308 = vmul.f32 %v304, 0.1
    %v309 = vmul.f32 %v305, 0.1
    %v310 = vsel %vm306, %v304, %v308
    %v311 = vsel %vm307, %v305, %v309
    %vm312 = vcmask 130048
    %v314 = vsel %vm312, %v214, 0
    %v317 = vsel %vm312, %v215, 0
    %319 = vmatpush.msra.mxu0 0.0
    %320 = vmatpush.msra.mxu0 0.0
    %321 = vmatpush.msra.mxu0 0.0
    %322 = vmatpush.msra.mxu0 0.0
    %323 = vmatpush.msra.mxu0 0.0
    %324 = vmatpush.msra.mxu0 0.0
    %325 = vmatpush.msra.mxu0 0.0
    %326 = vmatpush.msra.mxu0 0.0
    %327 = vmatpush.msra.mxu0 0.0
    %328 = vmatpush.msra.mxu0 0.0
    %329 = vmatpush.msra.mxu0 0.0
    %330 = vmatpush.msra.mxu0 0.0
    %331 = vmatpush.msra.mxu0 0.0
    %332 = vmatpush.msra.mxu0 0.0
    %333 = vmatpush.msra.mxu0 %v311
    %334 = vmatpush.msra.mxu0 %v310
    %335 = vmatmul.f32.gmra.mxu0 %v314
    %v336 = vpop.f32.mrf.mxu0
    %v337 = vadd.f32 0.0, %v336
    %338 = vmatmul.f32.gmra.mxu0 %v317
    %v339 = vpop.f32.mrf.mxu0
    %v340 = vadd.f32 0.0, %v339
    %341 = vdwg.mxu0
    %v343 = vsel %vm312, %v216, 0
    %v346 = vsel %vm312, %v217, 0
    %348 = vmatpush.msra.mxu0 0.0
    %349 = vmatpush.msra.mxu0 0.0
    %350 = vmatpush.msra.mxu0 0.0
    %351 = vmatpush.msra.mxu0 0.0
    %352 = vmatpush.msra.mxu0 0.0
    %353 = vmatpush.msra.mxu0 0.0
    %354 = vmatpush.msra.mxu0 0.0
    %355 = vmatpush.msra.mxu0 0.0
    %356 = vmatpush.msra.mxu0 0.0
    %357 = vmatpush.msra.mxu0 0.0
    %358 = vmatpush.msra.mxu0 0.0
    %359 = vmatpush.msra.mxu0 0.0
    %360 = vmatpush.msra.mxu0 0.0
    %361 = vmatpush.msra.mxu0 0.0
    %362 = vmatpush.msra.mxu0 %v311
    %363 = vmatpush.msra.mxu0 %v310
    %364 = vmatmul.f32.gmra.mxu0 %v343
    %v365 = vpop.f32.mrf.mxu0
    %v366 = vadd.f32 0.0, %v365
    %367 = vmatmul.f32.gmra.mxu0 %v346
    %v368 = vpop.f32.mrf.mxu0
    %v369 = vadd.f32 0.0, %v368
    %370 = vdwg.mxu0
    %v371 = vld [vmem:[#allocation14] sm:$0xff]
    %v372 = vld [vmem:[#allocation14 + $0x8] sm:$0xff]
    %v373 = vld [vmem:[#allocation14 + $0x10] sm:$0xff]
    %v374 = vld [vmem:[#allocation14 + $0x18] sm:$0xff]
    %v375 = vld [vmem:[#allocation14 + $0x20] sm:$0xff]
    %v376 = vld [vmem:[#allocation14 + $0x28] sm:$0xff]
    %v377 = vld [vmem:[#allocation14 + $0x30] sm:$0xff]
    %v378 = vld [vmem:[#allocation14 + $0x38] sm:$0xff]
    %v379 = vld [vmem:[#allocation14 + $0x40] sm:$0xff]
    %v380 = vld [vmem:[#allocation14 + $0x48] sm:$0xff]
    %v381 = vld [vmem:[#allocation14 + $0x50] sm:$0xff]
    %v382 = vld [vmem:[#allocation14 + $0x58] sm:$0xff]
    %v383 = vld [vmem:[#allocation14 + $0x60] sm:$0xff]
    %v384 = vld [vmem:[#allocation14 + $0x68] sm:$0xff]
    %v385 = vld [vmem:[#allocation14 + $0x70] sm:$0xff]
    %v386 = vld [vmem:[#allocation14 + $0x78] sm:$0xff]
    %s387 = scalar_lea.vmem [#allocation14], 128
    %v388 = vld [vmem:[%s387] sm:$0xff]
    %v389 = vld [vmem:[%s387 + $0x8] sm:$0xff]
    %v390 = vld [vmem:[%s387 + $0x10] sm:$0xff]
    %v391 = vld [vmem:[%s387 + $0x18] sm:$0xff]
    %v392 = vld [vmem:[%s387 + $0x20] sm:$0xff]
    %v393 = vld [vmem:[%s387 + $0x28] sm:$0xff]
    %v394 = vld [vmem:[%s387 + $0x30] sm:$0xff]
    %v395 = vld [vmem:[%s387 + $0x38] sm:$0xff]
    %v396 = vld [vmem:[%s387 + $0x40] sm:$0xff]
    %v397 = vld [vmem:[%s387 + $0x48] sm:$0xff]
    %v398 = vld [vmem:[%s387 + $0x50] sm:$0xff]
    %v399 = vld [vmem:[%s387 + $0x58] sm:$0xff]
    %v400 = vld [vmem:[%s387 + $0x60] sm:$0xff]
    %v401 = vld [vmem:[%s387 + $0x68] sm:$0xff]
    %v402 = vld [vmem:[%s387 + $0x70] sm:$0xff]
    %v403 = vld [vmem:[%s387 + $0x78] sm:$0xff]
    %404 = vmatpush.msra.mxu0 %v403
    %405 = vmatpush.msra.mxu0 %v402
    %406 = vmatpush.msra.mxu0 %v401
    %407 = vmatpush.msra.mxu0 %v400
    %408 = vmatpush.msra.mxu0 %v399
    %409 = vmatpush.msra.mxu0 %v398
    %410 = vmatpush.msra.mxu0 %v397
    %411 = vmatpush.msra.mxu0 %v396
    %412 = vmatpush.msra.mxu0 %v395
    %413 = vmatpush.msra.mxu0 %v394
    %414 = vmatpush.msra.mxu0 %v393
    %415 = vmatpush.msra.mxu0 %v392
    %416 = vmatpush.msra.mxu0 %v391
    %417 = vmatpush.msra.mxu0 %v390
    %418 = vmatpush.msra.mxu0 %v389
    %419 = vmatpush.msra.mxu0 %v388
    %420 = vmatmul.f32.gmra.mxu0 %v310
    %v421 = vpop.f32.mrf.mxu0
    %v422 = vadd.f32 0.0, %v421
    %423 = vmatmul.f32.gmra.mxu0 %v311
    %v424 = vpop.f32.mrf.mxu0
    %v425 = vadd.f32 0.0, %v424
    %426 = vdwg.mxu0
    %427 = vmatpush.msra.mxu0 %v386
    %428 = vmatpush.msra.mxu0 %v385
    %429 = vmatpush.msra.mxu0 %v384
    %430 = vmatpush.msra.mxu0 %v383
    %431 = vmatpush.msra.mxu0 %v382
    %432 = vmatpush.msra.mxu0 %v381
    %433 = vmatpush.msra.mxu0 %v380
    %434 = vmatpush.msra.mxu0 %v379
    %435 = vmatpush.msra.mxu0 %v378
    %436 = vmatpush.msra.mxu0 %v377
    %437 = vmatpush.msra.mxu0 %v376
    %438 = vmatpush.msra.mxu0 %v375
    %439 = vmatpush.msra.mxu0 %v374
    %440 = vmatpush.msra.mxu0 %v373
    %441 = vmatpush.msra.mxu0 %v372
    %442 = vmatpush.msra.mxu0 %v371
    %443 = vmatmul.f32.gmra.mxu0 %v337
    %v444 = vpop.f32.mrf.mxu0
    %v445 = vadd.f32 %v422, %v444
    %446 = vmatmul.f32.gmra.mxu0 %v340
    %v447 = vpop.f32.mrf.mxu0
    %v448 = vadd.f32 %v425, %v447
    %449 = vdwg.mxu0
    %s450 = scalar_lea.vmem [#allocation14], 256
    %v451 = vld [vmem:[%s450] sm:$0xff]
    %v452 = vld [vmem:[%s450 + $0x8] sm:$0xff]
    %v453 = vld [vmem:[%s450 + $0x10] sm:$0xff]
    %v454 = vld [vmem:[%s450 + $0x18] sm:$0xff]
    %v455 = vld [vmem:[%s450 + $0x20] sm:$0xff]
    %v456 = vld [vmem:[%s450 + $0x28] sm:$0xff]
    %v457 = vld [vmem:[%s450 + $0x30] sm:$0xff]
    %v458 = vld [vmem:[%s450 + $0x38] sm:$0xff]
    %v459 = vld [vmem:[%s450 + $0x40] sm:$0xff]
    %v460 = vld [vmem:[%s450 + $0x48] sm:$0xff]
    %v461 = vld [vmem:[%s450 + $0x50] sm:$0xff]
    %v462 = vld [vmem:[%s450 + $0x58] sm:$0xff]
    %v463 = vld [vmem:[%s450 + $0x60] sm:$0xff]
    %v464 = vld [vmem:[%s450 + $0x68] sm:$0xff]
    %v465 = vld [vmem:[%s450 + $0x70] sm:$0xff]
    %v466 = vld [vmem:[%s450 + $0x78] sm:$0xff]
    %467 = vmatpush.msra.mxu0 %v466
    %468 = vmatpush.msra.mxu0 %v465
    %469 = vmatpush.msra.mxu0 %v464
    %470 = vmatpush.msra.mxu0 %v463
    %471 = vmatpush.msra.mxu0 %v462
    %472 = vmatpush.msra.mxu0 %v461
    %473 = vmatpush.msra.mxu0 %v460
    %474 = vmatpush.msra.mxu0 %v459
    %475 = vmatpush.msra.mxu0 %v458
    %476 = vmatpush.msra.mxu0 %v457
    %477 = vmatpush.msra.mxu0 %v456
    %478 = vmatpush.msra.mxu0 %v455
    %479 = vmatpush.msra.mxu0 %v454
    %480 = vmatpush.msra.mxu0 %v453
    %481 = vmatpush.msra.mxu0 %v452
    %482 = vmatpush.msra.mxu0 %v451
    %483 = vmatmul.f32.gmra.mxu0 %v366
    %v484 = vpop.f32.mrf.mxu0
    %v485 = vadd.f32 0.0, %v484
    %486 = vmatmul.f32.gmra.mxu0 %v369
    %v487 = vpop.f32.mrf.mxu0
    %v488 = vadd.f32 0.0, %v487
    %489 = vdwg.mxu0
    %v490 = vadd.f32 %v445, %v485
    %v491 = vadd.f32 %v448, %v488
    %v492 = vld [vmem:[#allocation7] sm:$0x1]
    %v493 = vld [vmem:[#allocation8] sm:$0x1]
    %494 = vmatpush.msra.mxu0 %v213
    %495 = vmatpush.msra.mxu0 %v212
    %496 = vmatpush.msra.mxu0 %v211
    %497 = vmatpush.msra.mxu0 %v210
    %498 = vmatpush.msra.mxu0 %v209
    %499 = vmatpush.msra.mxu0 %v208
    %500 = vmatpush.msra.mxu0 %v207
    %501 = vmatpush.msra.mxu0 %v206
    %502 = vmatpush.msra.mxu0 %v205
    %503 = vmatpush.msra.mxu0 %v204
    %504 = vmatpush.msra.mxu0 %v203
    %505 = vmatpush.msra.mxu0 %v202
    %506 = vmatpush.msra.mxu0 %v201
    %507 = vmatpush.msra.mxu0 %v200
    %508 = vmatpush.msra.mxu0 %v199
    %509 = vmatpush.msra.mxu0 %v198
    %510 = vmatmul.f32.gmra.mxu0 %v490
    %v511 = vpop.f32.mrf.mxu0
    %v512 = vadd.f32 0.0, %v511
    %513 = vmatmul.f32.gmra.mxu0 %v491
    %v514 = vpop.f32.mrf.mxu0
    %v515 = vadd.f32 0.0, %v514
    %516 = vdwg.mxu0
    %v517 = vadd.f32 %v512, %v515
    %v518 = vrot.slane %v517, 4
    %v519 = vadd.f32 %v517, %v518
    %v520 = vrot.slane %v519, 2
    %v521 = vadd.f32 %v519, %v520
    %v522 = vrot.slane %v521, 1
    %v523 = vadd.f32 %v521, %v522
    %v524 = vsub.f32 %v490, %v523
    %v525 = vsub.f32 %v491, %v523
    %v526 = vmul.f32 %v524, %v524
    %v527 = vmul.f32 %v525, %v525
    %528 = vmatpush.msra.mxu0 %v213
    %529 = vmatpush.msra.mxu0 %v212
    %530 = vmatpush.msra.mxu0 %v211
    %531 = vmatpush.msra.mxu0 %v210
    %532 = vmatpush.msra.mxu0 %v209
    %533 = vmatpush.msra.mxu0 %v208
    %534 = vmatpush.msra.mxu0 %v207
    %535 = vmatpush.msra.mxu0 %v206
    %536 = vmatpush.msra.mxu0 %v205
    %537 = vmatpush.msra.mxu0 %v204
    %538 = vmatpush.msra.mxu0 %v203
    %539 = vmatpush.msra.mxu0 %v202
    %540 = vmatpush.msra.mxu0 %v201
    %541 = vmatpush.msra.mxu0 %v200
    %542 = vmatpush.msra.mxu0 %v199
    %543 = vmatpush.msra.mxu0 %v198
    %544 = vmatmul.f32.gmra.mxu0 %v526
    %v545 = vpop.f32.mrf.mxu0
    %v546 = vadd.f32 0.0, %v545
    %547 = vmatmul.f32.gmra.mxu0 %v527
    %v548 = vpop.f32.mrf.mxu0
    %v549 = vadd.f32 0.0, %v548
    %550 = vdwg.mxu0
    %v551 = vadd.f32 %v546, %v549
    %v552 = vrot.slane %v551, 4
    %v553 = vadd.f32 %v551, %v552
    %v554 = vrot.slane %v553, 2
    %v555 = vadd.f32 %v553, %v554
    %v556 = vrot.slane %v555, 1
    %v557 = vadd.f32 %v555, %v556
    %v558 = vadd.f32 %v557, 1e-05
    %v559 = vrsqrt.pop %v558
    %v560 = vmul.f32 %v559, %v558
    %v561 = vmul.f32 %v560, %v559
    %v562 = vmul.f32 0.5, %v561
    %v563 = vsub.f32 1.5, %v562
    %v564 = vmul.f32 %v559, %v563
    %vm565 = vweird.f32 %v558
    %vm566 = vweird.f32 %v559
    %vm567 = vmor %vm565, %vm566
    %v568 = vsel %vm567, %v559, %v564
    %v569 = vmul.f32 %v492, %v568
    %v571 = vperm.slane %v569, 0
    %v573 = vmul.f32 %v524, %v571
    %v574 = vmul.f32 %v525, %v571
    %v576 = vperm.slane %v493, 0
    %v578 = vadd.f32 %v573, %v576
    %v579 = vadd.f32 %v574, %v576
    %vm580 = vcmp.ge.f32.partialorder %v578, 0.0
    %vm581 = vcmp.ge.f32.partialorder %v579, 0.0
    %v582 = vmul.f32 %v578, 0.1
    %v583 = vmul.f32 %v579, 0.1
    %v584 = vsel %vm580, %v578, %v582
    %v585 = vsel %vm581, %v579, %v583
    %v586 = vld [vmem:[%s1] sm:$0xff]
    %v587 = vsub.f32 0.0, %v586
    %v588 = vmul.f32 %v587, 1.442695
    %v589 = vpow.pop %v588
    %v590 = vadd.f32 %v589, 1.0
    %v591 = vrcp.pop %v590
    %v592 = vmul.f32 %v590, %v591
    %v593 = vsub.f32 1.0, %v592
    %v594 = vmul.f32 %v591, %v593
    %v595 = vadd.f32 %v591, %v594
    %vm596 = vweird.f32 %v590
    %vm597 = vweird.f32 %v591
    %vm598 = vmor %vm596, %vm597
    %v599 = vsel %vm598, %v591, %v595
    %v600 = vand.u32 2147483647, %v590
    %vm601 = vcmp.eq.f32.partialorder %v600, 8.507059e+37
    %v602 = vand.u32 %v590, 2147483648
    %v603 = vor.u32 1.1754944e-38, %v602
    %v604 = vsel %vm601, %v603, %v599
    %v605 = vmul.f32 1.0, %v604
    %v606 = vmul.f32 %v586, %v605
    %v607 = vld [vmem:[#allocation17] sm:$0xff]
    %v608 = vld [vmem:[#allocation17 + $0x8] sm:$0xff]
    %v609 = vld [vmem:[#allocation17 + $0x10] sm:$0xff]
    %v610 = vld [vmem:[#allocation17 + $0x18] sm:$0xff]
    %v611 = vld [vmem:[#allocation17 + $0x20] sm:$0xff]
    %v612 = vld [vmem:[#allocation17 + $0x28] sm:$0xff]
    %v613 = vld [vmem:[#allocation17 + $0x30] sm:$0xff]
    %v614 = vld [vmem:[#allocation17 + $0x38] sm:$0xff]
    %v615 = vld [vmem:[#allocation17 + $0x40] sm:$0xff]
    %v616 = vld [vmem:[#allocation17 + $0x48] sm:$0xff]
    %v617 = vld [vmem:[#allocation17 + $0x50] sm:$0xff]
    %v618 = vld [vmem:[#allocation17 + $0x58] sm:$0xff]
    %v619 = vld [vmem:[#allocation17 + $0x60] sm:$0xff]
    %v620 = vld [vmem:[#allocation17 + $0x68] sm:$0xff]
    %v621 = vld [vmem:[#allocation17 + $0x70] sm:$0xff]
    %v622 = vld [vmem:[#allocation17 + $0x78] sm:$0xff]
    %v623 = vld [vmem:[%s13] sm:$0x1]
    %v625 = vperm.slane %v623, 0
    %627 = vmatpush.msra.mxu0 %v622
    %628 = vmatpush.msra.mxu0 %v621
    %629 = vmatpush.msra.mxu0 %v620
    %630 = vmatpush.msra.mxu0 %v619
    %631 = vmatpush.msra.mxu0 %v618
    %632 = vmatpush.msra.mxu0 %v617
    %633 = vmatpush.msra.mxu0 %v616
    %634 = vmatpush.msra.mxu0 %v615
    %635 = vmatpush.msra.mxu0 %v614
    %636 = vmatpush.msra.mxu0 %v613
    %637 = vmatpush.msra.mxu0 %v612
    %638 = vmatpush.msra.mxu0 %v611
    %639 = vmatpush.msra.mxu0 %v610
    %640 = vmatpush.msra.mxu0 %v609
    %641 = vmatpush.msra.mxu0 %v608
    %642 = vmatpush.msra.mxu0 %v607
    %643 = vmatmul.f32.gmra.mxu0 %v606
    %v644 = vpop.f32.mrf.mxu0
    %v645 = vadd.f32 %v625, %v644
    %646 = vdwg.mxu0
    %v647 = vld [vmem:[%s9] sm:$0xff]
    %v648 = vld [vmem:[%s9 + $0x8] sm:$0xff]
    %vm649 = vcmask 64512
    %v651 = vsel %vm649, %v647, 0
    %v654 = vsel %vm649, %v648, 0
    %656 = vmatpush.msra.mxu0 0.0
    %657 = vmatpush.msra.mxu0 0.0
    %658 = vmatpush.msra.mxu0 0.0
    %659 = vmatpush.msra.mxu0 0.0
    %660 = vmatpush.msra.mxu0 0.0
    %661 = vmatpush.msra.mxu0 0.0
    %662 = vmatpush.msra.mxu0 0.0
    %663 = vmatpush.msra.mxu0 0.0
    %664 = vmatpush.msra.mxu0 0.0
    %665 = vmatpush.msra.mxu0 0.0
    %666 = vmatpush.msra.mxu0 0.0
    %667 = vmatpush.msra.mxu0 0.0
    %668 = vmatpush.msra.mxu0 0.0
    %669 = vmatpush.msra.mxu0 0.0
    %670 = vmatpush.msra.mxu0 0.0
    %671 = vmatpush.msra.mxu0 %v645
    %672 = vmatmul.f32.gmra.mxu0 %v651
    %v673 = vpop.f32.mrf.mxu0
    %v674 = vadd.f32 0.0, %v673
    %675 = vmatmul.f32.gmra.mxu0 %v654
    %v676 = vpop.f32.mrf.mxu0
    %v677 = vadd.f32 0.0, %v676
    %678 = vdwg.mxu0
    %v679 = vadd.f32 %v584, %v674
    %v680 = vadd.f32 %v585, %v677
    %681 = vmatpush.msra.mxu0 0.0
    %682 = vmatpush.msra.mxu0 0.0
    %683 = vmatpush.msra.mxu0 0.0
    %684 = vmatpush.msra.mxu0 0.0
    %685 = vmatpush.msra.mxu0 0.0
    %686 = vmatpush.msra.mxu0 0.0
    %687 = vmatpush.msra.mxu0 0.0
    %688 = vmatpush.msra.mxu0 0.0
    %689 = vmatpush.msra.mxu0 0.0
    %690 = vmatpush.msra.mxu0 0.0
    %691 = vmatpush.msra.mxu0 0.0
    %692 = vmatpush.msra.mxu0 0.0
    %693 = vmatpush.msra.mxu0 0.0
    %694 = vmatpush.msra.mxu0 0.0
    %695 = vmatpush.msra.mxu0 %v680
    %696 = vmatpush.msra.mxu0 %v679
    %697 = vmatmul.f32.gmra.mxu0 %v314
    %v698 = vpop.f32.mrf.mxu0
    %v699 = vadd.f32 0.0, %v698
    %700 = vmatmul.f32.gmra.mxu0 %v317
    %v701 = vpop.f32.mrf.mxu0
    %v702 = vadd.f32 0.0, %v701
    %703 = vdwg.mxu0
    %704 = vmatpush.msra.mxu0 0.0
    %705 = vmatpush.msra.mxu0 0.0
    %706 = vmatpush.msra.mxu0 0.0
    %707 = vmatpush.msra.mxu0 0.0
    %708 = vmatpush.msra.mxu0 0.0
    %709 = vmatpush.msra.mxu0 0.0
    %710 = vmatpush.msra.mxu0 0.0
    %711 = vmatpush.msra.mxu0 0.0
    %712 = vmatpush.msra.mxu0 0.0
    %713 = vmatpush.msra.mxu0 0.0
    %714 = vmatpush.msra.mxu0 0.0
    %715 = vmatpush.msra.mxu0 0.0
    %716 = vmatpush.msra.mxu0 0.0
    %717 = vmatpush.msra.mxu0 0.0
    %718 = vmatpush.msra.mxu0 %v680
    %719 = vmatpush.msra.mxu0 %v679
    %720 = vmatmul.f32.gmra.mxu0 %v343
    %v721 = vpop.f32.mrf.mxu0
    %v722 = vadd.f32 0.0, %v721
    %723 = vmatmul.f32.gmra.mxu0 %v346
    %v724 = vpop.f32.mrf.mxu0
    %v725 = vadd.f32 0.0, %v724
    %726 = vdwg.mxu0
    %v727 = vld [vmem:[#allocation16] sm:$0xff]
    %v728 = vld [vmem:[#allocation16 + $0x8] sm:$0xff]
    %v729 = vld [vmem:[#allocation16 + $0x10] sm:$0xff]
    %v730 = vld [vmem:[#allocation16 + $0x18] sm:$0xff]
    %v731 = vld [vmem:[#allocation16 + $0x20] sm:$0xff]
    %v732 = vld [vmem:[#allocation16 + $0x28] sm:$0xff]
    %v733 = vld [vmem:[#allocation16 + $0x30] sm:$0xff]
    %v734 = vld [vmem:[#allocation16 + $0x38] sm:$0xff]
    %v735 = vld [vmem:[#allocation16 + $0x40] sm:$0xff]
    %v736 = vld [vmem:[#allocation16 + $0x48] sm:$0xff]
    %v737 = vld [vmem:[#allocation16 + $0x50] sm:$0xff]
    %v738 = vld [vmem:[#allocation16 + $0x58] sm:$0xff]
    %v739 = vld [vmem:[#allocation16 + $0x60] sm:$0xff]
    %v740 = vld [vmem:[#allocation16 + $0x68] sm:$0xff]
    %v741 = vld [vmem:[#allocation16 + $0x70] sm:$0xff]
    %v742 = vld [vmem:[#allocation16 + $0x78] sm:$0xff]
    %s743 = scalar_lea.vmem [#allocation16], 128
    %v744 = vld [vmem:[%s743] sm:$0xff]
    %v745 = vld [vmem:[%s743 + $0x8] sm:$0xff]
    %v746 = vld [vmem:[%s743 + $0x10] sm:$0xff]
    %v747 = vld [vmem:[%s743 + $0x18] sm:$0xff]
    %v748 = vld [vmem:[%s743 + $0x20] sm:$0xff]
    %v749 = vld [vmem:[%s743 + $0x28] sm:$0xff]
    %v750 = vld [vmem:[%s743 + $0x30] sm:$0xff]
    %v751 = vld [vmem:[%s743 + $0x38] sm:$0xff]
    %v752 = vld [vmem:[%s743 + $0x40] sm:$0xff]
    %v753 = vld [vmem:[%s743 + $0x48] sm:$0xff]
    %v754 = vld [vmem:[%s743 + $0x50] sm:$0xff]
    %v755 = vld [vmem:[%s743 + $0x58] sm:$0xff]
    %v756 = vld [vmem:[%s743 + $0x60] sm:$0xff]
    %v757 = vld [vmem:[%s743 + $0x68] sm:$0xff]
    %v758 = vld [vmem:[%s743 + $0x70] sm:$0xff]
    %v759 = vld [vmem:[%s743 + $0x78] sm:$0xff]
    %760 = vmatpush.msra.mxu0 %v759
    %761 = vmatpush.msra.mxu0 %v758
    %762 = vmatpush.msra.mxu0 %v757
    %763 = vmatpush.msra.mxu0 %v756
    %764 = vmatpush.msra.mxu0 %v755
    %765 = vmatpush.msra.mxu0 %v754
    %766 = vmatpush.msra.mxu0 %v753
    %767 = vmatpush.msra.mxu0 %v752
    %768 = vmatpush.msra.mxu0 %v751
    %769 = vmatpush.msra.mxu0 %v750
    %770 = vmatpush.msra.mxu0 %v749
    %771 = vmatpush.msra.mxu0 %v748
    %772 = vmatpush.msra.mxu0 %v747
    %773 = vmatpush.msra.mxu0 %v746
    %774 = vmatpush.msra.mxu0 %v745
    %775 = vmatpush.msra.mxu0 %v744
    %776 = vmatmul.f32.gmra.mxu0 %v679
    %v777 = vpop.f32.mrf.mxu0
    %v778 = vadd.f32 0.0, %v777
    %779 = vmatmul.f32.gmra.mxu0 %v680
    %v780 = vpop.f32.mrf.mxu0
    %v781 = vadd.f32 0.0, %v780
    %782 = vdwg.mxu0
    %783 = vmatpush.msra.mxu0 %v742
    %784 = vmatpush.msra.mxu0 %v741
    %785 = vmatpush.msra.mxu0 %v740
    %786 = vmatpush.msra.mxu0 %v739
    %787 = vmatpush.msra.mxu0 %v738
    %788 = vmatpush.msra.mxu0 %v737
    %789 = vmatpush.msra.mxu0 %v736
    %790 = vmatpush.msra.mxu0 %v735
    %791 = vmatpush.msra.mxu0 %v734
    %792 = vmatpush.msra.mxu0 %v733
    %793 = vmatpush.msra.mxu0 %v732
    %794 = vmatpush.msra.mxu0 %v731
    %795 = vmatpush.msra.mxu0 %v730
    %796 = vmatpush.msra.mxu0 %v729
    %797 = vmatpush.msra.mxu0 %v728
    %798 = vmatpush.msra.mxu0 %v727
    %799 = vmatmul.f32.gmra.mxu0 %v699
    %v800 = vpop.f32.mrf.mxu0
    %v801 = vadd.f32 %v778, %v800
    %802 = vmatmul.f32.gmra.mxu0 %v702
    %v803 = vpop.f32.mrf.mxu0
    %v804 = vadd.f32 %v781, %v803
    %805 = vdwg.mxu0
    %s806 = scalar_lea.vmem [#allocation16], 256
    %v807 = vld [vmem:[%s806] sm:$0xff]
    %v808 = vld [vmem:[%s806 + $0x8] sm:$0xff]
    %v809 = vld [vmem:[%s806 + $0x10] sm:$0xff]
    %v810 = vld [vmem:[%s806 + $0x18] sm:$0xff]
    %v811 = vld [vmem:[%s806 + $0x20] sm:$0xff]
    %v812 = vld [vmem:[%s806 + $0x28] sm:$0xff]
    %v813 = vld [vmem:[%s806 + $0x30] sm:$0xff]
    %v814 = vld [vmem:[%s806 + $0x38] sm:$0xff]
    %v815 = vld [vmem:[%s806 + $0x40] sm:$0xff]
    %v816 = vld [vmem:[%s806 + $0x48] sm:$0xff]
    %v817 = vld [vmem:[%s806 + $0x50] sm:$0xff]
    %v818 = vld [vmem:[%s806 + $0x58] sm:$0xff]
    %v819 = vld [vmem:[%s806 + $0x60] sm:$0xff]
    %v820 = vld [vmem:[%s806 + $0x68] sm:$0xff]
    %v821 = vld [vmem:[%s806 + $0x70] sm:$0xff]
    %v822 = vld [vmem:[%s806 + $0x78] sm:$0xff]
    %823 = vmatpush.msra.mxu0 %v822
    %824 = vmatpush.msra.mxu0 %v821
    %825 = vmatpush.msra.mxu0 %v820
    %826 = vmatpush.msra.mxu0 %v819
    %827 = vmatpush.msra.mxu0 %v818
    %828 = vmatpush.msra.mxu0 %v817
    %829 = vmatpush.msra.mxu0 %v816
    %830 = vmatpush.msra.mxu0 %v815
    %831 = vmatpush.msra.mxu0 %v814
    %832 = vmatpush.msra.mxu0 %v813
    %833 = vmatpush.msra.mxu0 %v812
    %834 = vmatpush.msra.mxu0 %v811
    %835 = vmatpush.msra.mxu0 %v810
    %836 = vmatpush.msra.mxu0 %v809
    %837 = vmatpush.msra.mxu0 %v808
    %838 = vmatpush.msra.mxu0 %v807
    %839 = vmatmul.f32.gmra.mxu0 %v722
    %v840 = vpop.f32.mrf.mxu0
    %v841 = vadd.f32 0.0, %v840
    %842 = vmatmul.f32.gmra.mxu0 %v725
    %v843 = vpop.f32.mrf.mxu0
    %v844 = vadd.f32 0.0, %v843
    %845 = vdwg.mxu0
    %v846 = vadd.f32 %v801, %v841
    %v847 = vadd.f32 %v804, %v844
    %v848 = vadd.f32 %v196, %v846
    %v849 = vadd.f32 %v197, %v847
    %850 = vst [vmem:[#allocation19] sm:$0xff] %v848
    %851 = vst [vmem:[#allocation19 + $0x8] sm:$0xff] %v849
    // Predicated region
    $region98: #{tpu_custom_call.1} parent=1 // pred_check
      _
    $region99: #{tpu_custom_call.1} parent=1 // pred_check_branch
      %853 = sbr.rel (0) target = $region101
    $region100: #{tpu_custom_call.1} parent=1 // pred_region
      %855 = vsyncadd [#allocation4], 0
      %s856 = sshll.u32 [#allocation19], 4
      %s857 = int_to_ptr.vmem [resolvable:$true] %s856
      %s858 = sshll.u32 %s14, 4
      %s859 = int_to_ptr.hbm [resolvable:$true] %s858
      %864 = dma.vmem_to_hbm [thread:$0]  %s857, 256, %s859, [#allocation4], 128, 128, 8
    $region101: #{tpu_custom_call.1} parent=1 // pred_fallthru
      _
    // Predicated region
    $region102: #{tpu_custom_call.1} parent=1 // pred_check
      _
    $region103: #{tpu_custom_call.1} parent=1 // pred_check_branch
      %866 = sbr.rel (0) target = $region105
    $region104: #{tpu_custom_call.1} parent=1 // pred_region
      %868 = dma.done [#allocation4], 256
    $region105: #{tpu_custom_call.1} parent=1 // pred_fallthru
      _
    %869 = vsyncpa [#allocation3], 1
    %870 = vsyncpa [#allocation6], 1
    %871 = vsyncpa [#allocation9], 1
    %872 = vsyncpa [#allocation12], 1
    %873 = vsyncpa [#allocation15], 1
    %874 = vsyncpa [#allocation18], 1
    %875 = vsyncpa [#allocation4], 1

</llo_original>
